<compile_context>
chip_gen: v6e
topology: v6e:2x2x1
jax: 0.10.0
libtpu: 0.0.40
codegen_flags: <defaults>
</compile_context>

<pallas_src>
import jax
import jax.numpy as jnp
from jax import lax
from jax.experimental import pallas as pl
from jax.experimental.pallas import tpu as pltpu

IN_DIM = 14 * 2   # 28
H1 = 128
H2 = 64
OUT = 1


def _round_up(x, m):
    return (x + m - 1) // m * m


def _choose_tiling(B, tb_max, min_tiles=2):
    """Pick (tb_eff, num_tiles, b_pad): balanced 128-multiple lane tiles.

    - at least `min_tiles` tiles (both v7x TensorCores get work),
    - each tile >= 128 lanes,
    - tb_eff ~ round_up(cdiv(B, num_tiles), 128) -> padded waste < 128/tile.
    """
    b128 = _round_up(max(B, 1), 128)
    max_tiles = b128 // 128
    num_tiles = min(max(min_tiles, pl.cdiv(b128, max(tb_max, 128))), max_tiles)
    tb_eff = _round_up(pl.cdiv(B, num_tiles), 128)
    b_pad = num_tiles * tb_eff
    return tb_eff, num_tiles, b_pad


def _mlp_kernel(x_ref, w1t_ref, b1_ref, w2t_ref, b2_ref, w3_ref, b3_ref, o_ref,
                *, precision=None):
    # Batch lives on the LANE axis of every intermediate and of the output.
    mxu_dtype = w1t_ref.dtype                 # f32, or bf16 on the fast MXU path
    x = x_ref[...].astype(mxu_dtype)          # (TB, 28); cast is a no-op for f32

    # layer1 + ReLU (dropout1 is identity in eval mode).
    # Contract the feature axis of BOTH operands -> (H1, TB): batch-on-lanes
    # without any wrapper-side transpose of x.
    h1 = lax.dot_general(w1t_ref[...], x, (((1,), (1,)), ((), ())),
                         preferred_element_type=jnp.float32,
                         precision=precision)
    h1 = jnp.maximum(h1 + b1_ref[...], 0.0)    # (H1, TB) f32

    # layer2 + ReLU (dropout2 is identity in eval mode).
    h2 = jnp.dot(w2t_ref[...], h1.astype(mxu_dtype),
                 preferred_element_type=jnp.float32,
                 precision=precision)
    h2 = jnp.maximum(h2 + b2_ref[...], 0.0)    # (H2, TB) f32

    # layer3 + Sigmoid: a (., 64) @ (64, 1) MXU pass would waste nearly all of
    # its output columns, so contract on the otherwise-idle VPU (multiply) +
    # sublane reduce instead.
    z3 = jnp.sum(h2 * w3_ref[...], axis=0, keepdims=True) + b3_ref[...]   # (1, TB)
    o_ref[...] = jax.nn.sigmoid(z3)            # lane-dense (1, TB) slab


def just_open_pose_forward(x, params, *, tb=8192, use_bf16=False, min_tiles=2,
                           precision=None):
    """x: (B, 28) float32 -> (B, 1) float32 (inference semantics)."""
    w1t, b1, w2t, b2, w3, b3 = params
    B = x.shape[0]

    tb_eff, num_tiles, b_pad = _choose_tiling(B, tb, min_tiles)

    # Only the tiny single-tile case pads x (block larger than the array);
    # otherwise the ragged last tile is read directly from the unpadded input
    # (out-of-bounds lanes compute harmless garbage that is sliced away).
    if B < tb_eff:
        x = jnp.pad(x, ((0, tb_eff - B), (0, 0)))

    if use_bf16:
        # bf16 MXU *weight* operands; x is cast in-kernel (VPU), and bias-add /
        # ReLU / sigmoid / accumulation stay f32.  Keep False on v5e only if
        # you want strict f32 MXU inputs; numerically it runs everywhere.
        w1t = w1t.astype(jnp.bfloat16)
        w2t = w2t.astype(jnp.bfloat16)

    const = lambda shape: pl.BlockSpec(shape, lambda i: (0, 0))

    import functools
    kernel = functools.partial(_mlp_kernel, precision=precision)

    out = pl.pallas_call(
        kernel,
        out_shape=jax.ShapeDtypeStruct((1, b_pad), jnp.float32),
        grid=(num_tiles,),
        in_specs=[
            # x streams over batch tiles in its natural (B, 28) layout.
            pl.BlockSpec((tb_eff, IN_DIM), lambda i: (i, 0)),
            const((H1, IN_DIM)),   # w1^T  (out, in) torch layout
            const((H1, 1)),        # b1 column (broadcast over lanes)
            const((H2, H1)),       # w2^T
            const((H2, 1)),        # b2
            const((H2, OUT)),      # w3 column (VPU/XLU contraction)
            const((1, OUT)),       # b3
        ],
        out_specs=pl.BlockSpec((1, tb_eff), lambda i: (0, i)),  # lane-dense output
        compiler_params=pltpu.CompilerParams(
            dimension_semantics=("parallel",),      # shard batch tiles across TCs (v7x)
            vmem_limit_bytes=48 * 1024 * 1024,      # room for tb up to ~16K f32 on all gens
        ),
    )(x, w1t, b1, w2t, b2, w3, b3)

    return out[0, :B].reshape(B, OUT)


def init_params(key):
    """Params in kernel layout (torch.nn.Linear (out, in) weight layout):
       w1t (128, 28), b1 (128, 1), w2t (64, 128), b2 (64, 1), w3 (64, 1), b3 (1, 1).
       Init mimics torch's default U[-1/sqrt(fan_in), 1/sqrt(fan_in)].
    """
    ks = jax.random.split(key, 6)

    def uniform(k, shape, fan_in):
        bound = 1.0 / jnp.sqrt(jnp.float32(fan_in))
        return jax.random.uniform(k, shape, jnp.float32, -bound, bound)

    w1t = uniform(ks[0], (H1, IN_DIM), IN_DIM)
    b1 = uniform(ks[1], (H1, 1), IN_DIM)
    w2t = uniform(ks[2], (H2, H1), H1)
    b2 = uniform(ks[3], (H2, 1), H1)
    w3 = uniform(ks[4], (H2, OUT), H2)   # = layer3.weight.T as a column
    b3 = uniform(ks[5], (1, OUT), H2)
    return (w1t, b1, w2t, b2, w3, b3)


def _reference(x, params):
    w1t, b1, w2t, b2, w3, b3 = params
    h1 = jnp.maximum(x @ w1t.T + b1[:, 0], 0.0)
    h2 = jnp.maximum(h1 @ w2t.T + b2[:, 0], 0.0)
    return jax.nn.sigmoid(h2 @ w3 + b3[0, 0])


if __name__ == "__main__":
    key = jax.random.PRNGKey(0)
    k_x, k_p, k_x2 = jax.random.split(key, 3)

    params = init_params(k_p)

    # Tiny batch (28 features = 14 keypoints * 2 coords): single 128-lane tile.
    B = 8
    x = jax.random.normal(k_x, (B, IN_DIM), dtype=jnp.float32)
    out = jax.block_until_ready(just_open_pose_forward(x, params))
    ref = _reference(x, params)
    assert out.shape == (B, OUT)
    assert jnp.allclose(out, ref, atol=1e-5, rtol=1e-5)

    # Mid-size batch, default tile cap: 2 balanced tiles (megacore coverage on
    # v7x), ragged last input tile, no wrapper pad/transpose copies.
    B2 = 3000
    x2 = jax.random.normal(k_x2, (B2, IN_DIM), dtype=jnp.float32)
    out2 = jax.block_until_ready(just_open_pose_forward(x2, params))
    ref2 = _reference(x2, params)
    assert out2.shape == (B2, OUT)
    assert jnp.allclose(out2, ref2, atol=1e-5, rtol=1e-5)

    # Smaller tile cap -> 3-step pipelined grid (exercises multi-tile path).
    out3 = jax.block_until_ready(just_open_pose_forward(x2, params, tb=1024))
    assert out3.shape == (B2, OUT)
    assert jnp.allclose(out3, ref2, atol=1e-5, rtol=1e-5)

    # bf16 MXU-operand path (weights bf16, x cast in-kernel); relaxed tolerance.
    out_bf16 = jax.block_until_ready(
        just_open_pose_forward(x2, params, use_bf16=True))
    assert out_bf16.shape == (B2, OUT)
    assert jnp.allclose(out_bf16, ref2, atol=5e-2)

    print("KERNEL_OK")
</pallas_src>

<mosaic_0001>
module attributes {stable_mosaic.version = 11 : i64} {
  func.func @_mlp_kernel(%arg0: i32, %arg1: memref<128x28xf32, #tpu.memory_space<vmem>>, %arg2: memref<128x28xf32, #tpu.memory_space<vmem>>, %arg3: memref<128x1xf32, #tpu.memory_space<vmem>>, %arg4: memref<64x128xf32, #tpu.memory_space<vmem>>, %arg5: memref<64x1xf32, #tpu.memory_space<vmem>>, %arg6: memref<64x1xf32, #tpu.memory_space<vmem>>, %arg7: memref<1x1xf32, #tpu.memory_space<vmem>>, %arg8: memref<1x128xf32, #tpu.memory_space<vmem>>) attributes {dimension_semantics = [#tpu.dimension_semantics<parallel>], iteration_bounds = array<i64: 1>, scalar_prefetch = 0 : i64, scratch_operands = 0 : i64, tpu.core_type = #tpu.core_type<tc>, window_params = [{transform_indices = @transform_0, window_bounds = array<i64: 128, 28>}, {pipeline_mode = #tpu.pipeline_mode<synchronous>, transform_indices = @transform_1, window_bounds = array<i64: 128, 28>}, {pipeline_mode = #tpu.pipeline_mode<synchronous>, transform_indices = @transform_2, window_bounds = array<i64: 128, 1>}, {pipeline_mode = #tpu.pipeline_mode<synchronous>, transform_indices = @transform_3, window_bounds = array<i64: 64, 128>}, {pipeline_mode = #tpu.pipeline_mode<synchronous>, transform_indices = @transform_4, window_bounds = array<i64: 64, 1>}, {pipeline_mode = #tpu.pipeline_mode<synchronous>, transform_indices = @transform_5, window_bounds = array<i64: 64, 1>}, {pipeline_mode = #tpu.pipeline_mode<synchronous>, transform_indices = @transform_6, window_bounds = array<i64: 1, 1>}, {transform_indices = @transform_7, window_bounds = array<i64: 1, 128>}]} {
    %c0 = arith.constant 0 : index
    %c0_0 = arith.constant 0 : index
    %0 = vector.load %arg1[%c0, %c0_0] : memref<128x28xf32, #tpu.memory_space<vmem>>, vector<128x28xf32>
    %c0_1 = arith.constant 0 : index
    %c0_2 = arith.constant 0 : index
    %1 = vector.load %arg2[%c0_1, %c0_2] : memref<128x28xf32, #tpu.memory_space<vmem>>, vector<128x28xf32>
    %cst = arith.constant dense<0.000000e+00> : vector<128x128xf32>
    %2 = tpu.matmul %1, %0, %cst {dimension_numbers = #tpu.dot_dimension_numbers<[1], [1], [0], [0], [0, 0, 1, 0], [], []>} : vector<128x28xf32>, vector<128x28xf32>, vector<128x128xf32> -> vector<128x128xf32>
    %c0_3 = arith.constant 0 : index
    %c0_4 = arith.constant 0 : index
    %3 = vector.load %arg3[%c0_3, %c0_4] : memref<128x1xf32, #tpu.memory_space<vmem>>, vector<128x1xf32>
    %4 = vector.broadcast %3 : vector<128x1xf32> to vector<128x128xf32>
    %5 = arith.addf %2, %4 : vector<128x128xf32>
    %cst_5 = arith.constant 0.000000e+00 : f32
    %6 = vector.broadcast %cst_5 : f32 to vector<128x128xf32>
    %7 = arith.maximumf %5, %6 : vector<128x128xf32>
    %c0_6 = arith.constant 0 : index
    %c0_7 = arith.constant 0 : index
    %8 = vector.load %arg4[%c0_6, %c0_7] : memref<64x128xf32, #tpu.memory_space<vmem>>, vector<64x128xf32>
    %cst_8 = arith.constant dense<0.000000e+00> : vector<64x128xf32>
    %9 = tpu.matmul %8, %7, %cst_8 {dimension_numbers = #tpu.dot_dimension_numbers<[1], [0], [0], [1], [0, 0, 1, 1], [], []>} : vector<64x128xf32>, vector<128x128xf32>, vector<64x128xf32> -> vector<64x128xf32>
    %c0_9 = arith.constant 0 : index
    %c0_10 = arith.constant 0 : index
    %10 = vector.load %arg5[%c0_9, %c0_10] : memref<64x1xf32, #tpu.memory_space<vmem>>, vector<64x1xf32>
    %11 = vector.broadcast %10 : vector<64x1xf32> to vector<64x128xf32>
    %12 = arith.addf %9, %11 : vector<64x128xf32>
    %cst_11 = arith.constant 0.000000e+00 : f32
    %13 = vector.broadcast %cst_11 : f32 to vector<64x128xf32>
    %14 = arith.maximumf %12, %13 : vector<64x128xf32>
    %c0_12 = arith.constant 0 : index
    %c0_13 = arith.constant 0 : index
    %15 = vector.load %arg6[%c0_12, %c0_13] : memref<64x1xf32, #tpu.memory_space<vmem>>, vector<64x1xf32>
    %16 = vector.broadcast %15 : vector<64x1xf32> to vector<64x128xf32>
    %17 = arith.mulf %14, %16 : vector<64x128xf32>
    %cst_14 = arith.constant dense<0.000000e+00> : vector<128xf32>
    %18 = vector.multi_reduction <add>, %17, %cst_14 [0] : vector<64x128xf32> to vector<128xf32>
    %19 = vector.shape_cast %18 : vector<128xf32> to vector<1x128xf32>
    %c0_15 = arith.constant 0 : index
    %c0_16 = arith.constant 0 : index
    %20 = vector.load %arg7[%c0_15, %c0_16] : memref<1x1xf32, #tpu.memory_space<vmem>>, vector<1x1xf32>
    %21 = vector.broadcast %20 : vector<1x1xf32> to vector<1x128xf32>
    %22 = arith.addf %19, %21 : vector<1x128xf32>
    %23 = arith.negf %22 : vector<1x128xf32>
    %24 = math.exp %23 : vector<1x128xf32>
    %cst_17 = arith.constant 1.000000e+00 : f32
    %25 = vector.broadcast %cst_17 : f32 to vector<1x128xf32>
    %26 = arith.addf %25, %24 : vector<1x128xf32>
    %27 = arith.divf %25, %26 : vector<1x128xf32>
    %c0_18 = arith.constant 0 : index
    %c0_19 = arith.constant 0 : index
    %28 = vector.load %arg8[%c0_18, %c0_19] : memref<1x128xf32, #tpu.memory_space<vmem>>, vector<1x128xf32>
    tpu.vector_store %arg8[%c0_18, %c0_19], %27 {strides = array<i32>} : memref<1x128xf32, #tpu.memory_space<vmem>>, vector<1x128xf32>,
    return
  }
  func.func @transform_0(%arg0: i32) -> (i32, i32) {
    %c0_i32 = arith.constant 0 : i32
    %c0_i32_0 = arith.constant 0 : i32
    return %arg0, %c0_i32 : i32, i32
  }
  func.func @transform_1(%arg0: i32) -> (i32, i32) {
    %c0_i32 = arith.constant 0 : i32
    %c0_i32_0 = arith.constant 0 : i32
    %c0_i32_1 = arith.constant 0 : i32
    return %c0_i32, %c0_i32_0 : i32, i32
  }
  func.func @transform_2(%arg0: i32) -> (i32, i32) {
    %c0_i32 = arith.constant 0 : i32
    %c0_i32_0 = arith.constant 0 : i32
    %c0_i32_1 = arith.constant 0 : i32
    return %c0_i32, %c0_i32_0 : i32, i32
  }
  func.func @transform_3(%arg0: i32) -> (i32, i32) {
    %c0_i32 = arith.constant 0 : i32
    %c0_i32_0 = arith.constant 0 : i32
    %c0_i32_1 = arith.constant 0 : i32
    return %c0_i32, %c0_i32_0 : i32, i32
  }
  func.func @transform_4(%arg0: i32) -> (i32, i32) {
    %c0_i32 = arith.constant 0 : i32
    %c0_i32_0 = arith.constant 0 : i32
    %c0_i32_1 = arith.constant 0 : i32
    return %c0_i32, %c0_i32_0 : i32, i32
  }
  func.func @transform_5(%arg0: i32) -> (i32, i32) {
    %c0_i32 = arith.constant 0 : i32
    %c0_i32_0 = arith.constant 0 : i32
    %c0_i32_1 = arith.constant 0 : i32
    return %c0_i32, %c0_i32_0 : i32, i32
  }
  func.func @transform_6(%arg0: i32) -> (i32, i32) {
    %c0_i32 = arith.constant 0 : i32
    %c0_i32_0 = arith.constant 0 : i32
    %c0_i32_1 = arith.constant 0 : i32
    return %c0_i32, %c0_i32_0 : i32, i32
  }
  func.func @transform_7(%arg0: i32) -> (i32, i32) {
    %c0_i32 = arith.constant 0 : i32
    %c0_i32_0 = arith.constant 0 : i32
    return %c0_i32, %arg0 : i32, i32
  }
}

</mosaic_0001>

<llo_original>
// kernel: tpu_custom_call.1
$region0: #{tpu_custom_call.1}
  #allocation0 [shape = 'u32[]', space=smem, size = 0x4, offset = 0x4, fixed_abs, tag = 'smem constant byte address 0x4 - core index']
  #allocation1 [shape = 'u32[144,128]{1,0:T(1,128)}', space=vmem, size = 0x12000, scoped, tag = 'internal scratch']
  #allocation2 [shape = 'f32[1,1]{1,0:T(1,128)S(1)}', space=vmem, size = 0x200, scoped, tag = 'scoped memory for tpu_custom_call.1']
  %s0 = inlined_call_operand.vmem [shape: f32[128,28], index: 0, kind: input, shape index: {}]
  %s1 = inlined_call_operand.vmem [shape: f32[128,28], index: 1, kind: input, shape index: {}]
  %s2 = inlined_call_operand.vmem [shape: f32[128,1], index: 2, kind: input, shape index: {}]
  %s3 = inlined_call_operand.vmem [shape: f32[64,128], index: 3, kind: input, shape index: {}]
  %s4 = inlined_call_operand.vmem [shape: f32[64,1], index: 4, kind: input, shape index: {}]
  %s5 = inlined_call_operand.vmem [shape: f32[64,1], index: 5, kind: input, shape index: {}]
  %s6 = inlined_call_operand.<no memory space> [shape: f32[1,1], index: 6, kind: input, shape index: {}]
  %s7 = inlined_call_operand.hbm [shape: f32[1,128], index: 7, kind: output, shape index: {}]
  %s8 = sld [smem:[#allocation0]]
  $region38: #{tpu_custom_call.1} parent=0
    _
  %s10 = ssub.s32 1, %s8
  %s11 = scalar_select 0, %s10, %s8
  %v12 = vstv %s6
  %13 = vst [vmem:[#allocation2] sm:$0x1] %v12
  $region1: #{tpu_custom_call.1} parent=0
    #allocation3 [shape = 'u8[512]{0}', space=vmem, size = 0x400, scoped, tag = 'output window, operand 0, single buffered']
    #allocation4 [shape = 's32[1]{0}', space=sflag, size = 0x4, scoped, tag = 'scoped memory for tpu_custom_call.1']
    %14 = vsyncpa [#allocation4], 0
    // Predicated region
    $region2: #{tpu_custom_call.1} parent=1 // pred_check
      _
    $region3: #{tpu_custom_call.1} parent=1 // pred_check_branch
      %16 = sbr.rel (0) target = $region5
    $region4: #{tpu_custom_call.1} parent=1 // pred_region
      _
    $region5: #{tpu_custom_call.1} parent=1 // pred_fallthru
      _
    // Predicated region
    $region6: #{tpu_custom_call.1} parent=1 // pred_check
      _
    $region7: #{tpu_custom_call.1} parent=1 // pred_check_branch
      %18 = sbr.rel (0) target = $region9
    $region8: #{tpu_custom_call.1} parent=1 // pred_region
      _
    $region9: #{tpu_custom_call.1} parent=1 // pred_fallthru
      _
    // Predicated region
    $region10: #{tpu_custom_call.1} parent=1 // pred_check
      _
    $region11: #{tpu_custom_call.1} parent=1 // pred_check_branch
      %20 = sbr.rel (0) target = $region13
    $region12: #{tpu_custom_call.1} parent=1 // pred_region
      _
    $region13: #{tpu_custom_call.1} parent=1 // pred_fallthru
      _
    // Predicated region
    $region14: #{tpu_custom_call.1} parent=1 // pred_check
      _
    $region15: #{tpu_custom_call.1} parent=1 // pred_check_branch
      %22 = sbr.rel (0) target = $region17
    $region16: #{tpu_custom_call.1} parent=1 // pred_region
      _
    $region17: #{tpu_custom_call.1} parent=1 // pred_fallthru
      _
    // Predicated region
    $region18: #{tpu_custom_call.1} parent=1 // pred_check
      _
    $region19: #{tpu_custom_call.1} parent=1 // pred_check_branch
      %24 = sbr.rel (0) target = $region21
    $region20: #{tpu_custom_call.1} parent=1 // pred_region
      _
    $region21: #{tpu_custom_call.1} parent=1 // pred_fallthru
      _
    // Predicated region
    $region22: #{tpu_custom_call.1} parent=1 // pred_check
      _
    $region23: #{tpu_custom_call.1} parent=1 // pred_check_branch
      %26 = sbr.rel (0) target = $region25
    $region24: #{tpu_custom_call.1} parent=1 // pred_region
      _
    $region25: #{tpu_custom_call.1} parent=1 // pred_fallthru
      _
    // Predicated region
    $region26: #{tpu_custom_call.1} parent=1 // pred_check
      _
    $region27: #{tpu_custom_call.1} parent=1 // pred_check_branch
      %28 = sbr.rel (0) target = $region29
    $region28: #{tpu_custom_call.1} parent=1 // pred_region
      _
    $region29: #{tpu_custom_call.1} parent=1 // pred_fallthru
      _
    %v29 = vld [vmem:[%s0] sm:$0xff]
    %v30 = vld [vmem:[%s0 + $0x8] sm:$0xff]
    %v31 = vld [vmem:[%s0 + $0x10] sm:$0xff]
    %v32 = vld [vmem:[%s0 + $0x18] sm:$0xff]
    %v33 = vld [vmem:[%s0 + $0x20] sm:$0xff]
    %v34 = vld [vmem:[%s0 + $0x28] sm:$0xff]
    %v35 = vld [vmem:[%s0 + $0x30] sm:$0xff]
    %v36 = vld [vmem:[%s0 + $0x38] sm:$0xff]
    %v37 = vld [vmem:[%s0 + $0x40] sm:$0xff]
    %v38 = vld [vmem:[%s0 + $0x48] sm:$0xff]
    %v39 = vld [vmem:[%s0 + $0x50] sm:$0xff]
    %v40 = vld [vmem:[%s0 + $0x58] sm:$0xff]
    %v41 = vld [vmem:[%s0 + $0x60] sm:$0xff]
    %v42 = vld [vmem:[%s0 + $0x68] sm:$0xff]
    %v43 = vld [vmem:[%s0 + $0x70] sm:$0xff]
    %v44 = vld [vmem:[%s0 + $0x78] sm:$0xff]
    %v45 = vld [vmem:[%s1] sm:$0xff]
    %v46 = vld [vmem:[%s1 + $0x8] sm:$0xff]
    %v47 = vld [vmem:[%s1 + $0x10] sm:$0xff]
    %v48 = vld [vmem:[%s1 + $0x18] sm:$0xff]
    %v49 = vld [vmem:[%s1 + $0x20] sm:$0xff]
    %v50 = vld [vmem:[%s1 + $0x28] sm:$0xff]
    %v51 = vld [vmem:[%s1 + $0x30] sm:$0xff]
    %v52 = vld [vmem:[%s1 + $0x38] sm:$0xff]
    %v53 = vld [vmem:[%s1 + $0x40] sm:$0xff]
    %v54 = vld [vmem:[%s1 + $0x48] sm:$0xff]
    %v55 = vld [vmem:[%s1 + $0x50] sm:$0xff]
    %v56 = vld [vmem:[%s1 + $0x58] sm:$0xff]
    %v57 = vld [vmem:[%s1 + $0x60] sm:$0xff]
    %v58 = vld [vmem:[%s1 + $0x68] sm:$0xff]
    %v59 = vld [vmem:[%s1 + $0x70] sm:$0xff]
    %v60 = vld [vmem:[%s1 + $0x78] sm:$0xff]
    %v61 = vld [vmem:[%s2] sm:$0xff]
    %v62 = vld [vmem:[%s2 + $0x8] sm:$0xff]
    %v63 = vld [vmem:[%s2 + $0x10] sm:$0xff]
    %v64 = vld [vmem:[%s2 + $0x18] sm:$0xff]
    %v65 = vld [vmem:[%s2 + $0x20] sm:$0xff]
    %v66 = vld [vmem:[%s2 + $0x28] sm:$0xff]
    %v67 = vld [vmem:[%s2 + $0x30] sm:$0xff]
    %v68 = vld [vmem:[%s2 + $0x38] sm:$0xff]
    %v69 = vld [vmem:[%s2 + $0x40] sm:$0xff]
    %v70 = vld [vmem:[%s2 + $0x48] sm:$0xff]
    %v71 = vld [vmem:[%s2 + $0x50] sm:$0xff]
    %v72 = vld [vmem:[%s2 + $0x58] sm:$0xff]
    %v73 = vld [vmem:[%s2 + $0x60] sm:$0xff]
    %v74 = vld [vmem:[%s2 + $0x68] sm:$0xff]
    %v75 = vld [vmem:[%s2 + $0x70] sm:$0xff]
    %v76 = vld [vmem:[%s2 + $0x78] sm:$0xff]
    %78 = vset.pattern.permute.xlu0 0
    %79 = vperm.xlu0 %78, %v61
    %v80 = vpop.permute.xlu0 %79
    %83 = vset.pattern.permute.xlu0 0
    %84 = vperm.xlu0 %83, %v62
    %v85 = vpop.permute.xlu0 %84
    %88 = vset.pattern.permute.xlu0 0
    %89 = vperm.xlu0 %88, %v63
    %v90 = vpop.permute.xlu0 %89
    %93 = vset.pattern.permute.xlu0 0
    %94 = vperm.xlu0 %93, %v64
    %v95 = vpop.permute.xlu0 %94
    %98 = vset.pattern.permute.xlu0 0
    %99 = vperm.xlu0 %98, %v65
    %v100 = vpop.permute.xlu0 %99
    %103 = vset.pattern.permute.xlu0 0
    %104 = vperm.xlu0 %103, %v66
    %v105 = vpop.permute.xlu0 %104
    %108 = vset.pattern.permute.xlu0 0
    %109 = vperm.xlu0 %108, %v67
    %v110 = vpop.permute.xlu0 %109
    %113 = vset.pattern.permute.xlu0 0
    %114 = vperm.xlu0 %113, %v68
    %v115 = vpop.permute.xlu0 %114
    %118 = vset.pattern.permute.xlu0 0
    %119 = vperm.xlu0 %118, %v69
    %v120 = vpop.permute.xlu0 %119
    %123 = vset.pattern.permute.xlu0 0
    %124 = vperm.xlu0 %123, %v70
    %v125 = vpop.permute.xlu0 %124
    %128 = vset.pattern.permute.xlu0 0
    %129 = vperm.xlu0 %128, %v71
    %v130 = vpop.permute.xlu0 %129
    %133 = vset.pattern.permute.xlu0 0
    %134 = vperm.xlu0 %133, %v72
    %v135 = vpop.permute.xlu0 %134
    %138 = vset.pattern.permute.xlu0 0
    %139 = vperm.xlu0 %138, %v73
    %v140 = vpop.permute.xlu0 %139
    %143 = vset.pattern.permute.xlu0 0
    %144 = vperm.xlu0 %143, %v74
    %v145 = vpop.permute.xlu0 %144
    %148 = vset.pattern.permute.xlu0 0
    %149 = vperm.xlu0 %148, %v75
    %v150 = vpop.permute.xlu0 %149
    %153 = vset.pattern.permute.xlu0 0
    %154 = vperm.xlu0 %153, %v76
    %v155 = vpop.permute.xlu0 %154
    %vm157 = vcmask 228352
    %v159 = vsel %vm157, %v45, 0
    %v162 = vsel %vm157, %v46, 0
    %v165 = vsel %vm157, %v47, 0
    %v168 = vsel %vm157, %v48, 0
    %v171 = vsel %vm157, %v49, 0
    %v174 = vsel %vm157, %v50, 0
    %v177 = vsel %vm157, %v51, 0
    %v180 = vsel %vm157, %v52, 0
    %v183 = vsel %vm157, %v53, 0
    %v186 = vsel %vm157, %v54, 0
    %v189 = vsel %vm157, %v55, 0
    %v192 = vsel %vm157, %v56, 0
    %v195 = vsel %vm157, %v57, 0
    %v198 = vsel %vm157, %v58, 0
    %v201 = vsel %vm157, %v59, 0
    %v204 = vsel %vm157, %v60, 0
    %v207 = vsel %vm157, %v29, 0
    %v210 = vsel %vm157, %v30, 0
    %v213 = vsel %vm157, %v31, 0
    %v216 = vsel %vm157, %v32, 0
    %v219 = vsel %vm157, %v33, 0
    %v222 = vsel %vm157, %v34, 0
    %v225 = vsel %vm157, %v35, 0
    %v228 = vsel %vm157, %v36, 0
    %v231 = vsel %vm157, %v37, 0
    %v234 = vsel %vm157, %v38, 0
    %v237 = vsel %vm157, %v39, 0
    %v240 = vsel %vm157, %v40, 0
    %v243 = vsel %vm157, %v41, 0
    %v246 = vsel %vm157, %v42, 0
    %v249 = vsel %vm157, %v43, 0
    %v252 = vsel %vm157, %v44, 0
    %254 = vmatprep.subr.mxu0 0.0
    %255 = vmatpush1.xpose.msra.mxu0 %v252
    %256 = vmatprep.subr.mxu0 0.0
    %257 = vmatpush1.xpose.msra.mxu0 %v249
    %258 = vmatprep.subr.mxu0 0.0
    %259 = vmatpush1.xpose.msra.mxu0 %v246
    %260 = vmatprep.subr.mxu0 0.0
    %261 = vmatpush1.xpose.msra.mxu0 %v243
    %262 = vmatprep.subr.mxu0 0.0
    %263 = vmatpush1.xpose.msra.mxu0 %v240
    %264 = vmatprep.subr.mxu0 0.0
    %265 = vmatpush1.xpose.msra.mxu0 %v237
    %266 = vmatprep.subr.mxu0 0.0
    %267 = vmatpush1.xpose.msra.mxu0 %v234
    %268 = vmatprep.subr.mxu0 0.0
    %269 = vmatpush1.xpose.msra.mxu0 %v231
    %270 = vmatprep.subr.mxu0 0.0
    %271 = vmatpush1.xpose.msra.mxu0 %v228
    %272 = vmatprep.subr.mxu0 0.0
    %273 = vmatpush1.xpose.msra.mxu0 %v225
    %274 = vmatprep.subr.mxu0 0.0
    %275 = vmatpush1.xpose.msra.mxu0 %v222
    %276 = vmatprep.subr.mxu0 0.0
    %277 = vmatpush1.xpose.msra.mxu0 %v219
    %278 = vmatprep.subr.mxu0 0.0
    %279 = vmatpush1.xpose.msra.mxu0 %v216
    %280 = vmatprep.subr.mxu0 0.0
    %281 = vmatpush1.xpose.msra.mxu0 %v213
    %282 = vmatprep.subr.mxu0 0.0
    %283 = vmatpush1.xpose.msra.mxu0 %v210
    %284 = vmatprep.subr.mxu0 0.0
    %285 = vmatpush1.xpose.msra.mxu0 %v207
    %286 = vmatprep.subr.mxu0 0.0
    %287 = vmatpush2.xpose.msra.mxu0 0.0
    %288 = vmatprep.subr.mxu0 0.0
    %289 = vmatpush2.xpose.msra.mxu0 0.0
    %290 = vmatprep.subr.mxu0 0.0
    %291 = vmatpush2.xpose.msra.mxu0 0.0
    %292 = vmatprep.subr.mxu0 0.0
    %293 = vmatpush2.xpose.msra.mxu0 0.0
    %294 = vmatprep.subr.mxu0 0.0
    %295 = vmatpush2.xpose.msra.mxu0 0.0
    %296 = vmatprep.subr.mxu0 0.0
    %297 = vmatpush2.xpose.msra.mxu0 0.0
    %298 = vmatprep.subr.mxu0 0.0
    %299 = vmatpush2.xpose.msra.mxu0 0.0
    %300 = vmatprep.subr.mxu0 0.0
    %301 = vmatpush2.xpose.msra.mxu0 0.0
    %302 = vmatprep.subr.mxu0 0.0
    %303 = vmatpush2.xpose.msra.mxu0 0.0
    %304 = vmatprep.subr.mxu0 0.0
    %305 = vmatpush2.xpose.msra.mxu0 0.0
    %306 = vmatprep.subr.mxu0 0.0
    %307 = vmatpush2.xpose.msra.mxu0 0.0
    %308 = vmatprep.subr.mxu0 0.0
    %309 = vmatpush2.xpose.msra.mxu0 0.0
    %310 = vmatprep.subr.mxu0 0.0
    %311 = vmatpush2.xpose.msra.mxu0 0.0
    %312 = vmatprep.subr.mxu0 0.0
    %313 = vmatpush2.xpose.msra.mxu0 0.0
    %314 = vmatprep.subr.mxu0 0.0
    %315 = vmatpush2.xpose.msra.mxu0 0.0
    %316 = vmatprep.subr.mxu0 0.0
    %317 = vmatpush2.xpose.msra.mxu0 0.0
    %318 = vmatprep.mubr.f32.mxu0 0.0
    %319 = vmatmul.mubr.f32.gmra.mxu0 %v159
    %v320 = vpop.f32.mrf.mxu0
    %v321 = vadd.f32 %v80, %v320
    %v322 = vpop.f32.mrf.mxu0
    %323 = vmatprep.mubr.f32.mxu0 0.0
    %324 = vmatmul.mubr.f32.gmra.mxu0 %v162
    %v325 = vpop.f32.mrf.mxu0
    %v326 = vadd.f32 %v85, %v325
    %v327 = vpop.f32.mrf.mxu0
    %328 = vmatprep.mubr.f32.mxu0 0.0
    %329 = vmatmul.mubr.f32.gmra.mxu0 %v165
    %v330 = vpop.f32.mrf.mxu0
    %v331 = vadd.f32 %v90, %v330
    %v332 = vpop.f32.mrf.mxu0
    %333 = vmatprep.mubr.f32.mxu0 0.0
    %334 = vmatmul.mubr.f32.gmra.mxu0 %v168
    %v335 = vpop.f32.mrf.mxu0
    %v336 = vadd.f32 %v95, %v335
    %v337 = vpop.f32.mrf.mxu0
    %338 = vmatprep.mubr.f32.mxu0 0.0
    %339 = vmatmul.mubr.f32.gmra.mxu0 %v171
    %v340 = vpop.f32.mrf.mxu0
    %v341 = vadd.f32 %v100, %v340
    %v342 = vpop.f32.mrf.mxu0
    %343 = vmatprep.mubr.f32.mxu0 0.0
    %344 = vmatmul.mubr.f32.gmra.mxu0 %v174
    %v345 = vpop.f32.mrf.mxu0
    %v346 = vadd.f32 %v105, %v345
    %v347 = vpop.f32.mrf.mxu0
    %348 = vmatprep.mubr.f32.mxu0 0.0
    %349 = vmatmul.mubr.f32.gmra.mxu0 %v177
    %v350 = vpop.f32.mrf.mxu0
    %v351 = vadd.f32 %v110, %v350
    %v352 = vpop.f32.mrf.mxu0
    %353 = vmatprep.mubr.f32.mxu0 0.0
    %354 = vmatmul.mubr.f32.gmra.mxu0 %v180
    %v355 = vpop.f32.mrf.mxu0
    %v356 = vadd.f32 %v115, %v355
    %v357 = vpop.f32.mrf.mxu0
    %358 = vmatprep.mubr.f32.mxu0 0.0
    %359 = vmatmul.mubr.f32.gmra.mxu0 %v183
    %v360 = vpop.f32.mrf.mxu0
    %v361 = vadd.f32 %v120, %v360
    %v362 = vpop.f32.mrf.mxu0
    %363 = vmatprep.mubr.f32.mxu0 0.0
    %364 = vmatmul.mubr.f32.gmra.mxu0 %v186
    %v365 = vpop.f32.mrf.mxu0
    %v366 = vadd.f32 %v125, %v365
    %v367 = vpop.f32.mrf.mxu0
    %368 = vmatprep.mubr.f32.mxu0 0.0
    %369 = vmatmul.mubr.f32.gmra.mxu0 %v189
    %v370 = vpop.f32.mrf.mxu0
    %v371 = vadd.f32 %v130, %v370
    %v372 = vpop.f32.mrf.mxu0
    %373 = vmatprep.mubr.f32.mxu0 0.0
    %374 = vmatmul.mubr.f32.gmra.mxu0 %v192
    %v375 = vpop.f32.mrf.mxu0
    %v376 = vadd.f32 %v135, %v375
    %v377 = vpop.f32.mrf.mxu0
    %378 = vmatprep.mubr.f32.mxu0 0.0
    %379 = vmatmul.mubr.f32.gmra.mxu0 %v195
    %v380 = vpop.f32.mrf.mxu0
    %v381 = vadd.f32 %v140, %v380
    %v382 = vpop.f32.mrf.mxu0
    %383 = vmatprep.mubr.f32.mxu0 0.0
    %384 = vmatmul.mubr.f32.gmra.mxu0 %v198
    %v385 = vpop.f32.mrf.mxu0
    %v386 = vadd.f32 %v145, %v385
    %v387 = vpop.f32.mrf.mxu0
    %388 = vmatprep.mubr.f32.mxu0 0.0
    %389 = vmatmul.mubr.f32.gmra.mxu0 %v201
    %v390 = vpop.f32.mrf.mxu0
    %v391 = vadd.f32 %v150, %v390
    %v392 = vpop.f32.mrf.mxu0
    %393 = vmatprep.mubr.f32.mxu0 0.0
    %394 = vmatmul.mubr.f32.gmra.mxu0 %v204
    %v395 = vpop.f32.mrf.mxu0
    %v396 = vadd.f32 %v155, %v395
    %v397 = vpop.f32.mrf.mxu0
    %398 = vdwg.mxu0
    %v399 = vmax.f32 %v321, 0.0
    %v400 = vmax.f32 %v326, 0.0
    %v401 = vmax.f32 %v331, 0.0
    %v402 = vmax.f32 %v336, 0.0
    %v403 = vmax.f32 %v341, 0.0
    %v404 = vmax.f32 %v346, 0.0
    %v405 = vmax.f32 %v351, 0.0
    %v406 = vmax.f32 %v356, 0.0
    %v407 = vmax.f32 %v361, 0.0
    %v408 = vmax.f32 %v366, 0.0
    %v409 = vmax.f32 %v371, 0.0
    %v410 = vmax.f32 %v376, 0.0
    %v411 = vmax.f32 %v381, 0.0
    %v412 = vmax.f32 %v386, 0.0
    %v413 = vmax.f32 %v391, 0.0
    %v414 = vmax.f32 %v396, 0.0
    %v415 = vld [vmem:[%s3] sm:$0xff]
    %v416 = vld [vmem:[%s3 + $0x8] sm:$0xff]
    %v417 = vld [vmem:[%s3 + $0x10] sm:$0xff]
    %v418 = vld [vmem:[%s3 + $0x18] sm:$0xff]
    %v419 = vld [vmem:[%s3 + $0x20] sm:$0xff]
    %v420 = vld [vmem:[%s3 + $0x28] sm:$0xff]
    %v421 = vld [vmem:[%s3 + $0x30] sm:$0xff]
    %v422 = vld [vmem:[%s3 + $0x38] sm:$0xff]
    %v423 = vld [vmem:[%s4] sm:$0xff]
    %v424 = vld [vmem:[%s4 + $0x8] sm:$0xff]
    %v425 = vld [vmem:[%s4 + $0x10] sm:$0xff]
    %v426 = vld [vmem:[%s4 + $0x18] sm:$0xff]
    %v427 = vld [vmem:[%s4 + $0x20] sm:$0xff]
    %v428 = vld [vmem:[%s4 + $0x28] sm:$0xff]
    %v429 = vld [vmem:[%s4 + $0x30] sm:$0xff]
    %v430 = vld [vmem:[%s4 + $0x38] sm:$0xff]
    %432 = vset.pattern.permute.xlu0 0
    %433 = vperm.xlu0 %432, %v423
    %v434 = vpop.permute.xlu0 %433
    %437 = vset.pattern.permute.xlu0 0
    %438 = vperm.xlu0 %437, %v424
    %v439 = vpop.permute.xlu0 %438
    %442 = vset.pattern.permute.xlu0 0
    %443 = vperm.xlu0 %442, %v425
    %v444 = vpop.permute.xlu0 %443
    %447 = vset.pattern.permute.xlu0 0
    %448 = vperm.xlu0 %447, %v426
    %v449 = vpop.permute.xlu0 %448
    %452 = vset.pattern.permute.xlu0 0
    %453 = vperm.xlu0 %452, %v427
    %v454 = vpop.permute.xlu0 %453
    %457 = vset.pattern.permute.xlu0 0
    %458 = vperm.xlu0 %457, %v428
    %v459 = vpop.permute.xlu0 %458
    %462 = vset.pattern.permute.xlu0 0
    %463 = vperm.xlu0 %462, %v429
    %v464 = vpop.permute.xlu0 %463
    %467 = vset.pattern.permute.xlu0 0
    %468 = vperm.xlu0 %467, %v430
    %v469 = vpop.permute.xlu0 %468
    %471 = vmatprep.subr.mxu0 0.0
    %472 = vmatpush1.msra.mxu0 %v414
    %473 = vmatprep.subr.mxu0 0.0
    %474 = vmatpush1.msra.mxu0 %v413
    %475 = vmatprep.subr.mxu0 0.0
    %476 = vmatpush1.msra.mxu0 %v412
    %477 = vmatprep.subr.mxu0 0.0
    %478 = vmatpush1.msra.mxu0 %v411
    %479 = vmatprep.subr.mxu0 0.0
    %480 = vmatpush1.msra.mxu0 %v410
    %481 = vmatprep.subr.mxu0 0.0
    %482 = vmatpush1.msra.mxu0 %v409
    %483 = vmatprep.subr.mxu0 0.0
    %484 = vmatpush1.msra.mxu0 %v408
    %485 = vmatprep.subr.mxu0 0.0
    %486 = vmatpush1.msra.mxu0 %v407
    %487 = vmatprep.subr.mxu0 0.0
    %488 = vmatpush1.msra.mxu0 %v406
    %489 = vmatprep.subr.mxu0 0.0
    %490 = vmatpush1.msra.mxu0 %v405
    %491 = vmatprep.subr.mxu0 0.0
    %492 = vmatpush1.msra.mxu0 %v404
    %493 = vmatprep.subr.mxu0 0.0
    %494 = vmatpush1.msra.mxu0 %v403
    %495 = vmatprep.subr.mxu0 0.0
    %496 = vmatpush1.msra.mxu0 %v402
    %497 = vmatprep.subr.mxu0 0.0
    %498 = vmatpush1.msra.mxu0 %v401
    %499 = vmatprep.subr.mxu0 0.0
    %500 = vmatpush1.msra.mxu0 %v400
    %501 = vmatprep.subr.mxu0 0.0
    %502 = vmatpush1.msra.mxu0 %v399
    %503 = vmatprep.subr.mxu0 0.0
    %504 = vmatpush2.msra.mxu0 0.0
    %505 = vmatprep.subr.mxu0 0.0
    %506 = vmatpush2.msra.mxu0 0.0
    %507 = vmatprep.subr.mxu0 0.0
    %508 = vmatpush2.msra.mxu0 0.0
    %509 = vmatprep.subr.mxu0 0.0
    %510 = vmatpush2.msra.mxu0 0.0
    %511 = vmatprep.subr.mxu0 0.0
    %512 = vmatpush2.msra.mxu0 0.0
    %513 = vmatprep.subr.mxu0 0.0
    %514 = vmatpush2.msra.mxu0 0.0
    %515 = vmatprep.subr.mxu0 0.0
    %516 = vmatpush2.msra.mxu0 0.0
    %517 = vmatprep.subr.mxu0 0.0
    %518 = vmatpush2.msra.mxu0 0.0
    %519 = vmatprep.subr.mxu0 0.0
    %520 = vmatpush2.msra.mxu0 0.0
    %521 = vmatprep.subr.mxu0 0.0
    %522 = vmatpush2.msra.mxu0 0.0
    %523 = vmatprep.subr.mxu0 0.0
    %524 = vmatpush2.msra.mxu0 0.0
    %525 = vmatprep.subr.mxu0 0.0
    %526 = vmatpush2.msra.mxu0 0.0
    %527 = vmatprep.subr.mxu0 0.0
    %528 = vmatpush2.msra.mxu0 0.0
    %529 = vmatprep.subr.mxu0 0.0
    %530 = vmatpush2.msra.mxu0 0.0
    %531 = vmatprep.subr.mxu0 0.0
    %532 = vmatpush2.msra.mxu0 0.0
    %533 = vmatprep.subr.mxu0 0.0
    %534 = vmatpush2.msra.mxu0 0.0
    %535 = vmatprep.mubr.f32.mxu0 0.0
    %536 = vmatmul.mubr.f32.gmra.mxu0 %v415
    %v537 = vpop.f32.mrf.mxu0
    %v538 = vadd.f32 %v434, %v537
    %v539 = vpop.f32.mrf.mxu0
    %540 = vmatprep.mubr.f32.mxu0 0.0
    %541 = vmatmul.mubr.f32.gmra.mxu0 %v416
    %v542 = vpop.f32.mrf.mxu0
    %v543 = vadd.f32 %v439, %v542
    %v544 = vpop.f32.mrf.mxu0
    %545 = vmatprep.mubr.f32.mxu0 0.0
    %546 = vmatmul.mubr.f32.gmra.mxu0 %v417
    %v547 = vpop.f32.mrf.mxu0
    %v548 = vadd.f32 %v444, %v547
    %v549 = vpop.f32.mrf.mxu0
    %550 = vmatprep.mubr.f32.mxu0 0.0
    %551 = vmatmul.mubr.f32.gmra.mxu0 %v418
    %v552 = vpop.f32.mrf.mxu0
    %v553 = vadd.f32 %v449, %v552
    %v554 = vpop.f32.mrf.mxu0
    %555 = vmatprep.mubr.f32.mxu0 0.0
    %556 = vmatmul.mubr.f32.gmra.mxu0 %v419
    %v557 = vpop.f32.mrf.mxu0
    %v558 = vadd.f32 %v454, %v557
    %v559 = vpop.f32.mrf.mxu0
    %560 = vmatprep.mubr.f32.mxu0 0.0
    %561 = vmatmul.mubr.f32.gmra.mxu0 %v420
    %v562 = vpop.f32.mrf.mxu0
    %v563 = vadd.f32 %v459, %v562
    %v564 = vpop.f32.mrf.mxu0
    %565 = vmatprep.mubr.f32.mxu0 0.0
    %566 = vmatmul.mubr.f32.gmra.mxu0 %v421
    %v567 = vpop.f32.mrf.mxu0
    %v568 = vadd.f32 %v464, %v567
    %v569 = vpop.f32.mrf.mxu0
    %570 = vmatprep.mubr.f32.mxu0 0.0
    %571 = vmatmul.mubr.f32.gmra.mxu0 %v422
    %v572 = vpop.f32.mrf.mxu0
    %v573 = vadd.f32 %v469, %v572
    %v574 = vpop.f32.mrf.mxu0
    %575 = vdwg.mxu0
    %v576 = vmax.f32 %v538, 0.0
    %v577 = vmax.f32 %v543, 0.0
    %v578 = vmax.f32 %v548, 0.0
    %v579 = vmax.f32 %v553, 0.0
    %v580 = vmax.f32 %v558, 0.0
    %v581 = vmax.f32 %v563, 0.0
    %v582 = vmax.f32 %v568, 0.0
    %v583 = vmax.f32 %v573, 0.0
    %v584 = vld [vmem:[%s5] sm:$0xff]
    %v585 = vld [vmem:[%s5 + $0x8] sm:$0xff]
    %v586 = vld [vmem:[%s5 + $0x10] sm:$0xff]
    %v587 = vld [vmem:[%s5 + $0x18] sm:$0xff]
    %v588 = vld [vmem:[%s5 + $0x20] sm:$0xff]
    %v589 = vld [vmem:[%s5 + $0x28] sm:$0xff]
    %v590 = vld [vmem:[%s5 + $0x30] sm:$0xff]
    %v591 = vld [vmem:[%s5 + $0x38] sm:$0xff]
    %593 = vset.pattern.permute.xlu0 0
    %594 = vperm.xlu0 %593, %v584
    %v595 = vpop.permute.xlu0 %594
    %598 = vset.pattern.permute.xlu0 0
    %599 = vperm.xlu0 %598, %v585
    %v600 = vpop.permute.xlu0 %599
    %603 = vset.pattern.permute.xlu0 0
    %604 = vperm.xlu0 %603, %v586
    %v605 = vpop.permute.xlu0 %604
    %608 = vset.pattern.permute.xlu0 0
    %609 = vperm.xlu0 %608, %v587
    %v610 = vpop.permute.xlu0 %609
    %613 = vset.pattern.permute.xlu0 0
    %614 = vperm.xlu0 %613, %v588
    %v615 = vpop.permute.xlu0 %614
    %618 = vset.pattern.permute.xlu0 0
    %619 = vperm.xlu0 %618, %v589
    %v620 = vpop.permute.xlu0 %619
    %623 = vset.pattern.permute.xlu0 0
    %624 = vperm.xlu0 %623, %v590
    %v625 = vpop.permute.xlu0 %624
    %628 = vset.pattern.permute.xlu0 0
    %629 = vperm.xlu0 %628, %v591
    %v630 = vpop.permute.xlu0 %629
    %v632 = vmul.f32 %v576, %v595
    %v633 = vmul.f32 %v577, %v600
    %v634 = vmul.f32 %v578, %v605
    %v635 = vmul.f32 %v579, %v610
    %v636 = vmul.f32 %v580, %v615
    %v637 = vmul.f32 %v581, %v620
    %v638 = vmul.f32 %v582, %v625
    %v639 = vmul.f32 %v583, %v630
    %v640 = vadd.f32 %v632, %v633
    %v641 = vadd.f32 %v640, %v634
    %v642 = vadd.f32 %v641, %v635
    %v643 = vadd.f32 %v642, %v636
    %v644 = vadd.f32 %v643, %v637
    %v645 = vadd.f32 %v644, %v638
    %v646 = vadd.f32 %v645, %v639
    %v647 = vrot.slane %v646, 4
    %v648 = vadd.f32 %v646, %v647
    %v649 = vrot.slane %v648, 2
    %v650 = vadd.f32 %v648, %v649
    %v651 = vrot.slane %v650, 1
    %v652 = vadd.f32 %v650, %v651
    %v653 = vld [vmem:[#allocation2] sm:$0x1]
    %655 = vset.pattern.permute.xlu0 0
    %656 = vperm.xlu0 %655, %v653
    %v657 = vpop.permute.xlu0 %656
    %v659 = vlaneseq
    %v660 = vshrl.u32 %v659, 7
    %v661 = vsub.s32 0, %v660
    %v662 = vrot.slane %v657, %v661
    %v663 = vadd.f32 %v652, %v662
    %v664 = vxor.u32 %v663, 2147483648
    %v665 = vmul.f32 %v664, 1.442695
    %v666 = vpow.pop %v665
    %v667 = vadd.f32 %v666, 1.0
    %v668 = vrcp.pop %v667
    %v669 = vmul.f32 1.0, %v668
    %670 = vst [vmem:[#allocation3] sm:$0x1] %v669
    // Predicated region
    $region30: #{tpu_custom_call.1} parent=1 // pred_check
      _
    $region31: #{tpu_custom_call.1} parent=1 // pred_check_branch
      %672 = sbr.rel (0) target = $region33
    $region32: #{tpu_custom_call.1} parent=1 // pred_region
      %s674 = ssub.s32 16, 16
      %675 = vsyncadd [#allocation4], %s674
      %s677 = sshll.u32 [#allocation3], 4
      %s678 = int_to_ptr.vmem [resolvable:$true] %s677
      %680 = dma.vmem_to_hbm [thread:$0]  %s678, 16, %s7, [#allocation4]
    $region33: #{tpu_custom_call.1} parent=1 // pred_fallthru
      _
    // Predicated region
    $region34: #{tpu_custom_call.1} parent=1 // pred_check
      _
    $region35: #{tpu_custom_call.1} parent=1 // pred_check_branch
      %682 = sbr.rel (0) target = $region37
    $region36: #{tpu_custom_call.1} parent=1 // pred_region
      %683 = dma.done [#allocation4], 16
    $region37: #{tpu_custom_call.1} parent=1 // pred_fallthru
      _
    %684 = vsyncpa [#allocation4], 1

</llo_original>
